<compile_context>
chip_gen: v6e
topology: v6e:2x2x1
jax: 0.10.0
libtpu: 0.0.40
codegen_flags: <defaults>
</compile_context>

<pallas_src>
import functools

import jax
import jax.numpy as jnp
from jax.experimental import pallas as pl
from jax.experimental.pallas import tpu as pltpu

INPUT_SIZE = 10
HIDDEN_SIZE = 32
OUTPUT_SIZE = 4
OUT_PAD = 8          # output lanes written by the kernel (4 real + 4 pad)
GATE_LANES = 128     # 4 * HIDDEN_SIZE fused gates: forget | input | output | cand
LN_EPS = 1e-5
TB_MAX = 1024        # batch-tile upper bound (sweep 1024-2048 if desired)


# ----------------------------------------------------------------------------
# Pallas kernel
# ----------------------------------------------------------------------------
def weather_xlstm_kernel(x_ref, w1_ref, w2_ref, vec_ref, w_out_ref, out_ref):
    H = HIDDEN_SIZE

    # --- vector parameters, loaded once (hoisted broadcasts) -----------------
    b1 = vec_ref[0:1, :]                           # fused (input_proj + cell1) bias (1,128)
    b2 = vec_ref[1:2, :]                           # cell2 fused gate bias            (1,128)
    eg1 = vec_ref[2:3, 0:H]
    lnw1 = vec_ref[2:3, H:2 * H]
    lnb1 = vec_ref[2:3, 2 * H:3 * H]
    eg2 = vec_ref[3:4, 0:H]
    lnw2 = vec_ref[3:4, H:2 * H]
    lnb2 = vec_ref[3:4, 2 * H:3 * H]
    b_out = vec_ref[4:5, 0:OUT_PAD]                # output bias (1,8), lanes 4:8 zero

    def dot(a, w):
        # Weights may be pre-cast to bf16 at pack time; only the activation is
        # cast per matmul. f32 MXU accumulation either way.
        if w.dtype == jnp.bfloat16:
            a = a.astype(jnp.bfloat16)
        return jnp.dot(a, w, preferred_element_type=jnp.float32)

    def cell(gates, eg, lnw, lnb):
        # One unmasked 128-lane sigmoid pass; sigmoid gates occupy lanes 0:96.
        sig = jax.nn.sigmoid(gates)
        forget = sig[:, 0:H]
        input_g = sig[:, H:2 * H]
        output = sig[:, 2 * H:3 * H]
        candidate = jnp.tanh(gates[:, 3 * H:4 * H])

        exp_factor = jnp.exp(eg * input_g)
        cell_state = forget * candidate * exp_factor
        hidden = output * jnp.tanh(cell_state)

        # LayerNorm over the hidden axis (biased variance, eps inside rsqrt),
        # matching torch.nn.LayerNorm.
        mu = jnp.mean(hidden, axis=-1, keepdims=True)
        var = jnp.mean(jnp.square(hidden - mu), axis=-1, keepdims=True)
        return (hidden - mu) * jax.lax.rsqrt(var + LN_EPS) * lnw + lnb

    # --- cell1 (input_proj folded into its fused-gate weights) ---------------
    x = x_ref[...]                                 # (TB, INPUT_SIZE)
    h = cell(dot(x, w1_ref[...]) + b1, eg1, lnw1, lnb1)

    # --- cell2 ----------------------------------------------------------------
    h = cell(dot(h, w2_ref[...]) + b2, eg2, lnw2, lnb2)

    # --- output projection: narrow (TB, 8) store -------------------------------
    out_ref[...] = (dot(h, w_out_ref[...]) + b_out).astype(out_ref.dtype)


# ----------------------------------------------------------------------------
# Wrapper: batch tiling + narrow output
# ----------------------------------------------------------------------------
def _round_up(n, m):
    return ((n + m - 1) // m) * m


@jax.jit
def weather_xlstm_forward(x, packed_params):
    if x.ndim == 1:
        x = x[None, :]
    batch = x.shape[0]

    # Batch tile: multiple of 8 sublanes, capped at TB_MAX; for batch >= 16
    # aim for at least 2 grid steps so both v7x TensorCores get work.
    if batch < 16:
        tb = _round_up(batch, 8)
    else:
        tb = min(TB_MAX, _round_up(-(-batch // 2), 8))
    bp = _round_up(batch, tb)
    if bp != batch:
        x = jnp.pad(x, ((0, bp - batch), (0, 0)))
    grid = (bp // tb,)

    w1, w2, vec_slab, w_out = packed_params

    def fixed(arr):
        shape = arr.shape
        return pl.BlockSpec(shape, lambda i, _nd=len(shape): (0,) * _nd)

    out_padded = pl.pallas_call(
        weather_xlstm_kernel,
        out_shape=jax.ShapeDtypeStruct((bp, OUT_PAD), jnp.float32),
        grid=grid,
        in_specs=[
            pl.BlockSpec((tb, INPUT_SIZE), lambda i: (i, 0)),   # x: batch-tiled
            fixed(w1),                                          # weights resident
            fixed(w2),
            fixed(vec_slab),
            fixed(w_out),
        ],
        out_specs=pl.BlockSpec((tb, OUT_PAD), lambda i: (i, 0)),
        compiler_params=pltpu.CompilerParams(
            dimension_semantics=("parallel",)),
    )(x, w1, w2, vec_slab, w_out)

    return out_padded[:batch, :OUTPUT_SIZE]


# ----------------------------------------------------------------------------
# Parameter construction (mirrors WeatherxLSTMModel.__init__) and packing
# ----------------------------------------------------------------------------
def _xavier_normal(key, out_features, in_features):
    # torch.nn.init.xavier_normal_: std = sqrt(2 / (fan_in + fan_out))
    std = (2.0 / (in_features + out_features)) ** 0.5
    return std * jax.random.normal(key, (out_features, in_features), jnp.float32)


def init_raw_params(key):
    """Torch-layout parameters: Linear weights are (out, in), biases (out,)."""
    keys = jax.random.split(key, 16)
    k_it = iter(keys)

    def linear(out_f, in_f):
        w = _xavier_normal(next(k_it), out_f, in_f)
        b = jnp.full((out_f,), 0.01, jnp.float32)
        return (w, b)

    def cell():
        return {
            "forget": linear(HIDDEN_SIZE, HIDDEN_SIZE),
            "input": linear(HIDDEN_SIZE, HIDDEN_SIZE),
            "candidate": linear(HIDDEN_SIZE, HIDDEN_SIZE),
            "output": linear(HIDDEN_SIZE, HIDDEN_SIZE),
            "exp_gate": jnp.full((HIDDEN_SIZE,), 0.1, jnp.float32),
            "ln_w": jnp.ones((HIDDEN_SIZE,), jnp.float32),
            "ln_b": jnp.zeros((HIDDEN_SIZE,), jnp.float32),
        }

    return {
        "input_proj": linear(HIDDEN_SIZE, INPUT_SIZE),
        "cell1": cell(),
        "cell2": cell(),
        "output_proj": linear(OUTPUT_SIZE, HIDDEN_SIZE),
    }


def pack_params(raw, use_bf16=False):
    """Pack torch-layout params into 4 kernel slabs.

    use_bf16=True pre-casts the weight slabs to bfloat16 once (recommended on
    v6e/v7x); biases / LayerNorm / exp_gate vectors stay f32.
    """
    H = HIDDEN_SIZE

    # Gate order: forget | input | output | candidate  (sigmoids in lanes 0:96)
    def cell_w(c):
        return jnp.concatenate(
            [c["forget"][0].T, c["input"][0].T, c["output"][0].T,
             c["candidate"][0].T], axis=1)                         # (32, 128)

    def cell_b(c):
        return jnp.concatenate(
            [c["forget"][1], c["input"][1], c["output"][1],
             c["candidate"][1]])                                   # (128,)

    wg1, bg1 = cell_w(raw["cell1"]), cell_b(raw["cell1"])
    wg2, bg2 = cell_w(raw["cell2"]), cell_b(raw["cell2"])

    # Fold input_proj into cell1 (exact: no nonlinearity in between).
    w_in_t = raw["input_proj"][0].T                                # (10, 32)
    b_in = raw["input_proj"][1]                                    # (32,)
    w1 = w_in_t @ wg1                                              # (10, 128)
    b1 = b_in @ wg1 + bg1                                          # (128,)

    # Output projection padded to 8 lanes only (narrow store in the kernel).
    w_out = jnp.zeros((H, OUT_PAD), jnp.float32)
    w_out = w_out.at[:, :OUTPUT_SIZE].set(raw["output_proj"][0].T)  # (32, 8)

    vec = jnp.zeros((8, GATE_LANES), jnp.float32)
    vec = vec.at[0, :].set(b1)
    vec = vec.at[1, :].set(bg2)
    for row, cname in ((2, "cell1"), (3, "cell2")):
        c = raw[cname]
        vec = vec.at[row, 0:H].set(c["exp_gate"])
        vec = vec.at[row, H:2 * H].set(c["ln_w"])
        vec = vec.at[row, 2 * H:3 * H].set(c["ln_b"])
    vec = vec.at[4, :OUTPUT_SIZE].set(raw["output_proj"][1])

    wdt = jnp.bfloat16 if use_bf16 else jnp.float32
    return (w1.astype(wdt), wg2.astype(wdt), vec, w_out.astype(wdt))


# ----------------------------------------------------------------------------
# Independent pure-JAX reference mirroring the PyTorch module exactly
# ----------------------------------------------------------------------------
def reference_forward(x, raw):
    if x.ndim == 1:
        x = x[None, :]

    def lin(v, wb):
        w, b = wb
        return v @ w.T + b

    def ref_cell(v, c):
        forget = jax.nn.sigmoid(lin(v, c["forget"]))
        input_g = jax.nn.sigmoid(lin(v, c["input"]))
        candidate = jnp.tanh(lin(v, c["candidate"]))
        output = jax.nn.sigmoid(lin(v, c["output"]))
        exp_factor = jnp.exp(c["exp_gate"] * input_g)
        cell_state = forget * candidate * exp_factor
        hidden = output * jnp.tanh(cell_state)
        mu = jnp.mean(hidden, axis=-1, keepdims=True)
        var = jnp.mean(jnp.square(hidden - mu), axis=-1, keepdims=True)
        return (hidden - mu) / jnp.sqrt(var + LN_EPS) * c["ln_w"] + c["ln_b"]

    h = lin(x, raw["input_proj"])
    h = ref_cell(h, raw["cell1"])
    h = ref_cell(h, raw["cell2"])
    return lin(h, raw["output_proj"])


# ----------------------------------------------------------------------------
if __name__ == "__main__":
    key = jax.random.PRNGKey(0)
    pkey, xkey, xkey2 = jax.random.split(key, 3)

    raw_params = init_raw_params(pkey)
    packed_f32 = pack_params(raw_params, use_bf16=False)
    packed_bf16 = pack_params(raw_params, use_bf16=True)

    # --- small-batch correctness (f32 weights; exact vs reference) ------------
    batch = 2
    x = jax.random.normal(xkey, (batch, INPUT_SIZE), jnp.float32)
    ref = jax.block_until_ready(reference_forward(x, raw_params))

    out_f32 = jax.block_until_ready(weather_xlstm_forward(x, packed_f32))
    assert out_f32.shape == (batch, OUTPUT_SIZE)
    # Folding input_proj into cell1 is exact algebra; only f32 rounding differs.
    assert jnp.allclose(out_f32, ref, atol=5e-5, rtol=1e-5)

    # --- bf16-weight path (recommended on v6e/v7x; keep f32 on v5e) -----------
    out_bf16 = jax.block_until_ready(weather_xlstm_forward(x, packed_bf16))
    assert out_bf16.shape == (batch, OUTPUT_SIZE)
    assert jnp.allclose(out_bf16, ref, atol=1e-1, rtol=1e-1)

    # --- multi-tile / padded-batch path ---------------------------------------
    batch2 = 200
    x2 = jax.random.normal(xkey2, (batch2, INPUT_SIZE), jnp.float32)
    ref2 = jax.block_until_ready(reference_forward(x2, raw_params))
    out2 = jax.block_until_ready(weather_xlstm_forward(x2, packed_f32))
    assert out2.shape == (batch2, OUTPUT_SIZE)
    assert jnp.allclose(out2, ref2, atol=5e-5, rtol=1e-5)

    print("KERNEL_OK")
</pallas_src>

<mosaic_0001>
module attributes {stable_mosaic.version = 11 : i64} {
  func.func @weather_xlstm_kernel(%arg0: i32, %arg1: memref<8x10xf32, #tpu.memory_space<vmem>>, %arg2: memref<10x128xf32, #tpu.memory_space<vmem>>, %arg3: memref<32x128xf32, #tpu.memory_space<vmem>>, %arg4: memref<8x128xf32, #tpu.memory_space<vmem>>, %arg5: memref<32x8xf32, #tpu.memory_space<vmem>>, %arg6: memref<8x8xf32, #tpu.memory_space<vmem>>) attributes {dimension_semantics = [#tpu.dimension_semantics<parallel>], iteration_bounds = array<i64: 1>, scalar_prefetch = 0 : i64, scratch_operands = 0 : i64, tpu.core_type = #tpu.core_type<tc>, window_params = [{transform_indices = @transform_0, window_bounds = array<i64: 8, 10>}, {pipeline_mode = #tpu.pipeline_mode<synchronous>, transform_indices = @transform_1, window_bounds = array<i64: 10, 128>}, {pipeline_mode = #tpu.pipeline_mode<synchronous>, transform_indices = @transform_2, window_bounds = array<i64: 32, 128>}, {pipeline_mode = #tpu.pipeline_mode<synchronous>, transform_indices = @transform_3, window_bounds = array<i64: 8, 128>}, {pipeline_mode = #tpu.pipeline_mode<synchronous>, transform_indices = @transform_4, window_bounds = array<i64: 32, 8>}, {transform_indices = @transform_5, window_bounds = array<i64: 8, 8>}]} {
    %c0 = arith.constant 0 : index
    %c0_0 = arith.constant 0 : index
    %0 = vector.load %arg4[%c0, %c0_0] : memref<8x128xf32, #tpu.memory_space<vmem>>, vector<1x128xf32>
    %c1 = arith.constant 1 : index
    %c0_1 = arith.constant 0 : index
    %1 = vector.load %arg4[%c1, %c0_1] : memref<8x128xf32, #tpu.memory_space<vmem>>, vector<1x128xf32>
    %c2 = arith.constant 2 : index
    %c0_2 = arith.constant 0 : index
    %2 = vector.load %arg4[%c2, %c0_2] : memref<8x128xf32, #tpu.memory_space<vmem>>, vector<1x32xf32>
    %c2_3 = arith.constant 2 : index
    %c32 = arith.constant 32 : index
    %3 = vector.load %arg4[%c2_3, %c32] : memref<8x128xf32, #tpu.memory_space<vmem>>, vector<1x32xf32>
    %c2_4 = arith.constant 2 : index
    %c64 = arith.constant 64 : index
    %4 = vector.load %arg4[%c2_4, %c64] : memref<8x128xf32, #tpu.memory_space<vmem>>, vector<1x32xf32>
    %c3 = arith.constant 3 : index
    %c0_5 = arith.constant 0 : index
    %5 = vector.load %arg4[%c3, %c0_5] : memref<8x128xf32, #tpu.memory_space<vmem>>, vector<1x32xf32>
    %c3_6 = arith.constant 3 : index
    %c32_7 = arith.constant 32 : index
    %6 = vector.load %arg4[%c3_6, %c32_7] : memref<8x128xf32, #tpu.memory_space<vmem>>, vector<1x32xf32>
    %c3_8 = arith.constant 3 : index
    %c64_9 = arith.constant 64 : index
    %7 = vector.load %arg4[%c3_8, %c64_9] : memref<8x128xf32, #tpu.memory_space<vmem>>, vector<1x32xf32>
    %c4 = arith.constant 4 : index
    %c0_10 = arith.constant 0 : index
    %8 = vector.load %arg4[%c4, %c0_10] : memref<8x128xf32, #tpu.memory_space<vmem>>, vector<1x8xf32>
    %c0_11 = arith.constant 0 : index
    %c0_12 = arith.constant 0 : index
    %9 = vector.load %arg1[%c0_11, %c0_12] : memref<8x10xf32, #tpu.memory_space<vmem>>, vector<8x10xf32>
    %c0_13 = arith.constant 0 : index
    %c0_14 = arith.constant 0 : index
    %10 = vector.load %arg2[%c0_13, %c0_14] : memref<10x128xf32, #tpu.memory_space<vmem>>, vector<10x128xf32>
    %cst = arith.constant dense<0.000000e+00> : vector<8x128xf32>
    %11 = tpu.matmul %9, %10, %cst {dimension_numbers = #tpu.dot_dimension_numbers<[1], [0], [0], [1], [0, 0, 1, 1], [], []>} : vector<8x10xf32>, vector<10x128xf32>, vector<8x128xf32> -> vector<8x128xf32>
    %12 = vector.broadcast %0 : vector<1x128xf32> to vector<8x128xf32>
    %13 = arith.addf %11, %12 : vector<8x128xf32>
    %14 = arith.negf %13 : vector<8x128xf32>
    %15 = math.exp %14 : vector<8x128xf32>
    %cst_15 = arith.constant 1.000000e+00 : f32
    %16 = vector.broadcast %cst_15 : f32 to vector<8x128xf32>
    %17 = arith.addf %16, %15 : vector<8x128xf32>
    %18 = arith.divf %16, %17 : vector<8x128xf32>
    %19 = vector.extract_strided_slice %18 {offsets = [0, 0], sizes = [8, 32], strides = [1, 1]} : vector<8x128xf32> to vector<8x32xf32>
    %20 = vector.extract_strided_slice %18 {offsets = [0, 32], sizes = [8, 32], strides = [1, 1]} : vector<8x128xf32> to vector<8x32xf32>
    %21 = vector.extract_strided_slice %18 {offsets = [0, 64], sizes = [8, 32], strides = [1, 1]} : vector<8x128xf32> to vector<8x32xf32>
    %22 = vector.extract_strided_slice %13 {offsets = [0, 96], sizes = [8, 32], strides = [1, 1]} : vector<8x128xf32> to vector<8x32xf32>
    %23 = math.tanh %22 : vector<8x32xf32>
    %24 = vector.broadcast %2 : vector<1x32xf32> to vector<8x32xf32>
    %25 = arith.mulf %24, %20 : vector<8x32xf32>
    %26 = math.exp %25 : vector<8x32xf32>
    %27 = arith.mulf %19, %23 : vector<8x32xf32>
    %28 = arith.mulf %27, %26 : vector<8x32xf32>
    %29 = math.tanh %28 : vector<8x32xf32>
    %30 = arith.mulf %21, %29 : vector<8x32xf32>
    %cst_16 = arith.constant dense<0.000000e+00> : vector<8xf32>
    %31 = vector.multi_reduction <add>, %30, %cst_16 [1] : vector<8x32xf32> to vector<8xf32>
    %32 = vector.shape_cast %31 : vector<8xf32> to vector<8x1xf32>
    %cst_17 = arith.constant 3.200000e+01 : f32
    %33 = vector.broadcast %cst_17 : f32 to vector<8x1xf32>
    %34 = arith.divf %32, %33 : vector<8x1xf32>
    %35 = vector.broadcast %34 : vector<8x1xf32> to vector<8x32xf32>
    %36 = arith.subf %30, %35 : vector<8x32xf32>
    %37 = arith.mulf %36, %36 : vector<8x32xf32>
    %cst_18 = arith.constant dense<0.000000e+00> : vector<8xf32>
    %38 = vector.multi_reduction <add>, %37, %cst_18 [1] : vector<8x32xf32> to vector<8xf32>
    %39 = vector.shape_cast %38 : vector<8xf32> to vector<8x1xf32>
    %cst_19 = arith.constant 3.200000e+01 : f32
    %40 = vector.broadcast %cst_19 : f32 to vector<8x1xf32>
    %41 = arith.divf %39, %40 : vector<8x1xf32>
    %42 = vector.broadcast %34 : vector<8x1xf32> to vector<8x32xf32>
    %43 = arith.subf %30, %42 : vector<8x32xf32>
    %cst_20 = arith.constant 9.99999974E-6 : f32
    %44 = vector.broadcast %cst_20 : f32 to vector<8x1xf32>
    %45 = arith.addf %41, %44 : vector<8x1xf32>
    %46 = math.rsqrt %45 : vector<8x1xf32>
    %47 = vector.broadcast %46 : vector<8x1xf32> to vector<8x32xf32>
    %48 = arith.mulf %43, %47 : vector<8x32xf32>
    %49 = vector.broadcast %3 : vector<1x32xf32> to vector<8x32xf32>
    %50 = arith.mulf %48, %49 : vector<8x32xf32>
    %51 = vector.broadcast %4 : vector<1x32xf32> to vector<8x32xf32>
    %52 = arith.addf %50, %51 : vector<8x32xf32>
    %c0_21 = arith.constant 0 : index
    %c0_22 = arith.constant 0 : index
    %53 = vector.load %arg3[%c0_21, %c0_22] : memref<32x128xf32, #tpu.memory_space<vmem>>, vector<32x128xf32>
    %cst_23 = arith.constant dense<0.000000e+00> : vector<8x128xf32>
    %54 = tpu.matmul %52, %53, %cst_23 {dimension_numbers = #tpu.dot_dimension_numbers<[1], [0], [0], [1], [0, 0, 1, 1], [], []>} : vector<8x32xf32>, vector<32x128xf32>, vector<8x128xf32> -> vector<8x128xf32>
    %55 = vector.broadcast %1 : vector<1x128xf32> to vector<8x128xf32>
    %56 = arith.addf %54, %55 : vector<8x128xf32>
    %57 = arith.negf %56 : vector<8x128xf32>
    %58 = math.exp %57 : vector<8x128xf32>
    %cst_24 = arith.constant 1.000000e+00 : f32
    %59 = vector.broadcast %cst_24 : f32 to vector<8x128xf32>
    %60 = arith.addf %59, %58 : vector<8x128xf32>
    %61 = arith.divf %59, %60 : vector<8x128xf32>
    %62 = vector.extract_strided_slice %61 {offsets = [0, 0], sizes = [8, 32], strides = [1, 1]} : vector<8x128xf32> to vector<8x32xf32>
    %63 = vector.extract_strided_slice %61 {offsets = [0, 32], sizes = [8, 32], strides = [1, 1]} : vector<8x128xf32> to vector<8x32xf32>
    %64 = vector.extract_strided_slice %61 {offsets = [0, 64], sizes = [8, 32], strides = [1, 1]} : vector<8x128xf32> to vector<8x32xf32>
    %65 = vector.extract_strided_slice %56 {offsets = [0, 96], sizes = [8, 32], strides = [1, 1]} : vector<8x128xf32> to vector<8x32xf32>
    %66 = math.tanh %65 : vector<8x32xf32>
    %67 = vector.broadcast %5 : vector<1x32xf32> to vector<8x32xf32>
    %68 = arith.mulf %67, %63 : vector<8x32xf32>
    %69 = math.exp %68 : vector<8x32xf32>
    %70 = arith.mulf %62, %66 : vector<8x32xf32>
    %71 = arith.mulf %70, %69 : vector<8x32xf32>
    %72 = math.tanh %71 : vector<8x32xf32>
    %73 = arith.mulf %64, %72 : vector<8x32xf32>
    %cst_25 = arith.constant dense<0.000000e+00> : vector<8xf32>
    %74 = vector.multi_reduction <add>, %73, %cst_25 [1] : vector<8x32xf32> to vector<8xf32>
    %75 = vector.shape_cast %74 : vector<8xf32> to vector<8x1xf32>
    %cst_26 = arith.constant 3.200000e+01 : f32
    %76 = vector.broadcast %cst_26 : f32 to vector<8x1xf32>
    %77 = arith.divf %75, %76 : vector<8x1xf32>
    %78 = vector.broadcast %77 : vector<8x1xf32> to vector<8x32xf32>
    %79 = arith.subf %73, %78 : vector<8x32xf32>
    %80 = arith.mulf %79, %79 : vector<8x32xf32>
    %cst_27 = arith.constant dense<0.000000e+00> : vector<8xf32>
    %81 = vector.multi_reduction <add>, %80, %cst_27 [1] : vector<8x32xf32> to vector<8xf32>
    %82 = vector.shape_cast %81 : vector<8xf32> to vector<8x1xf32>
    %cst_28 = arith.constant 3.200000e+01 : f32
    %83 = vector.broadcast %cst_28 : f32 to vector<8x1xf32>
    %84 = arith.divf %82, %83 : vector<8x1xf32>
    %85 = vector.broadcast %77 : vector<8x1xf32> to vector<8x32xf32>
    %86 = arith.subf %73, %85 : vector<8x32xf32>
    %cst_29 = arith.constant 9.99999974E-6 : f32
    %87 = vector.broadcast %cst_29 : f32 to vector<8x1xf32>
    %88 = arith.addf %84, %87 : vector<8x1xf32>
    %89 = math.rsqrt %88 : vector<8x1xf32>
    %90 = vector.broadcast %89 : vector<8x1xf32> to vector<8x32xf32>
    %91 = arith.mulf %86, %90 : vector<8x32xf32>
    %92 = vector.broadcast %6 : vector<1x32xf32> to vector<8x32xf32>
    %93 = arith.mulf %91, %92 : vector<8x32xf32>
    %94 = vector.broadcast %7 : vector<1x32xf32> to vector<8x32xf32>
    %95 = arith.addf %93, %94 : vector<8x32xf32>
    %c0_30 = arith.constant 0 : index
    %c0_31 = arith.constant 0 : index
    %96 = vector.load %arg5[%c0_30, %c0_31] : memref<32x8xf32, #tpu.memory_space<vmem>>, vector<32x8xf32>
    %cst_32 = arith.constant dense<0.000000e+00> : vector<8x8xf32>
    %97 = tpu.matmul %95, %96, %cst_32 {dimension_numbers = #tpu.dot_dimension_numbers<[1], [0], [0], [1], [0, 0, 1, 1], [], []>} : vector<8x32xf32>, vector<32x8xf32>, vector<8x8xf32> -> vector<8x8xf32>
    %98 = vector.broadcast %8 : vector<1x8xf32> to vector<8x8xf32>
    %99 = arith.addf %97, %98 : vector<8x8xf32>
    %c0_33 = arith.constant 0 : index
    %c0_34 = arith.constant 0 : index
    %100 = vector.load %arg6[%c0_33, %c0_34] : memref<8x8xf32, #tpu.memory_space<vmem>>, vector<8x8xf32>
    tpu.vector_store %arg6[%c0_33, %c0_34], %99 {strides = array<i32>} : memref<8x8xf32, #tpu.memory_space<vmem>>, vector<8x8xf32>,
    return
  }
  func.func @transform_0(%arg0: i32) -> (i32, i32) {
    %c0_i32 = arith.constant 0 : i32
    %c0_i32_0 = arith.constant 0 : i32
    return %arg0, %c0_i32 : i32, i32
  }
  func.func @transform_1(%arg0: i32) -> (i32, i32) {
    %c0_i32 = arith.constant 0 : i32
    %c0_i32_0 = arith.constant 0 : i32
    %c0_i32_1 = arith.constant 0 : i32
    return %c0_i32, %c0_i32_0 : i32, i32
  }
  func.func @transform_2(%arg0: i32) -> (i32, i32) {
    %c0_i32 = arith.constant 0 : i32
    %c0_i32_0 = arith.constant 0 : i32
    %c0_i32_1 = arith.constant 0 : i32
    return %c0_i32, %c0_i32_0 : i32, i32
  }
  func.func @transform_3(%arg0: i32) -> (i32, i32) {
    %c0_i32 = arith.constant 0 : i32
    %c0_i32_0 = arith.constant 0 : i32
    %c0_i32_1 = arith.constant 0 : i32
    return %c0_i32, %c0_i32_0 : i32, i32
  }
  func.func @transform_4(%arg0: i32) -> (i32, i32) {
    %c0_i32 = arith.constant 0 : i32
    %c0_i32_0 = arith.constant 0 : i32
    %c0_i32_1 = arith.constant 0 : i32
    return %c0_i32, %c0_i32_0 : i32, i32
  }
  func.func @transform_5(%arg0: i32) -> (i32, i32) {
    %c0_i32 = arith.constant 0 : i32
    %c0_i32_0 = arith.constant 0 : i32
    return %arg0, %c0_i32 : i32, i32
  }
}

</mosaic_0001>

<llo_original>
// kernel: weather_xlstm_forward.1
$region0: #{weather_xlstm_forward.1}
  #allocation0 [shape = 'u32[]', space=smem, size = 0x4, offset = 0x4, fixed_abs, tag = 'smem constant byte address 0x4 - core index']
  #allocation1 [shape = 'u32[144,128]{1,0:T(1,128)}', space=vmem, size = 0x12000, scoped, tag = 'internal scratch']
  %s0 = inlined_call_operand.vmem [shape: f32[8,10], index: 0, kind: input, shape index: {}]
  %s1 = inlined_call_operand.vmem [shape: f32[10,128], index: 1, kind: input, shape index: {}]
  %s2 = inlined_call_operand.vmem [shape: f32[32,128], index: 2, kind: input, shape index: {}]
  %s3 = inlined_call_operand.vmem [shape: f32[8,128], index: 3, kind: input, shape index: {}]
  %s4 = inlined_call_operand.vmem [shape: f32[32,8], index: 4, kind: input, shape index: {}]
  %s5 = inlined_call_operand.vmem [shape: f32[8,8], index: 5, kind: output, shape index: {}]
  %s6 = sld [smem:[#allocation0]]
  $region30: #{weather_xlstm_forward.1} parent=0
    _
  %s8 = ssub.s32 1, %s6
  %s9 = scalar_select 0, %s8, %s6
  // Predicated region
  $region2: #{weather_xlstm_forward.1} parent=0 // pred_check
    _
  $region3: #{weather_xlstm_forward.1} parent=0 // pred_check_branch
    %11 = sbr.rel (0) target = $region5
  $region4: #{weather_xlstm_forward.1} parent=0 // pred_region
    _
  $region5: #{weather_xlstm_forward.1} parent=0 // pred_fallthru
    _
  // Predicated region
  $region6: #{weather_xlstm_forward.1} parent=0 // pred_check
    _
  $region7: #{weather_xlstm_forward.1} parent=0 // pred_check_branch
    %13 = sbr.rel (0) target = $region9
  $region8: #{weather_xlstm_forward.1} parent=0 // pred_region
    _
  $region9: #{weather_xlstm_forward.1} parent=0 // pred_fallthru
    _
  // Predicated region
  $region10: #{weather_xlstm_forward.1} parent=0 // pred_check
    _
  $region11: #{weather_xlstm_forward.1} parent=0 // pred_check_branch
    %15 = sbr.rel (0) target = $region13
  $region12: #{weather_xlstm_forward.1} parent=0 // pred_region
    _
  $region13: #{weather_xlstm_forward.1} parent=0 // pred_fallthru
    _
  // Predicated region
  $region14: #{weather_xlstm_forward.1} parent=0 // pred_check
    _
  $region15: #{weather_xlstm_forward.1} parent=0 // pred_check_branch
    %17 = sbr.rel (0) target = $region17
  $region16: #{weather_xlstm_forward.1} parent=0 // pred_region
    _
  $region17: #{weather_xlstm_forward.1} parent=0 // pred_fallthru
    _
  // Predicated region
  $region18: #{weather_xlstm_forward.1} parent=0 // pred_check
    _
  $region19: #{weather_xlstm_forward.1} parent=0 // pred_check_branch
    %19 = sbr.rel (0) target = $region21
  $region20: #{weather_xlstm_forward.1} parent=0 // pred_region
    _
  $region21: #{weather_xlstm_forward.1} parent=0 // pred_fallthru
    _
  %v20 = vld [vmem:[%s3] sm:$0x1]
  %v21 = vld [vmem:[%s3 + $0x1] sm:$0x1]
  %v22 = vld [vmem:[%s3 + $0x2] sm:$0x1]
  %v23 = vld [vmem:[%s3 + $0x3] sm:$0x1]
  %v24 = vld [vmem:[%s3 + $0x4] sm:$0x1]
  %v25 = vld [vmem:[%s0] sm:$0xff]
  %v26 = vld [vmem:[%s1] sm:$0xff]
  %v27 = vld [vmem:[%s1 + $0x8] sm:$0x3]
  %v28 = vlaneseq
  %v29 = vshrl.u32 %v28, 7
  %v30 = vsub.s32 0, %v29
  %v31 = vrot.slane %v20, %v30
  %vm32 = vcmask 80896
  %v34 = vsel %vm32, %v25, 0
  %vm36 = vcmask 1041408
  %v38 = vsel %vm36, %v27, 0
  %40 = vmatprep.subr.mxu0 0.0
  %41 = vmatpush1.msra.mxu0 0.0
  %42 = vmatprep.subr.mxu0 0.0
  %43 = vmatpush1.msra.mxu0 0.0
  %44 = vmatprep.subr.mxu0 0.0
  %45 = vmatpush1.msra.mxu0 0.0
  %46 = vmatprep.subr.mxu0 0.0
  %47 = vmatpush1.msra.mxu0 0.0
  %48 = vmatprep.subr.mxu0 0.0
  %49 = vmatpush1.msra.mxu0 0.0
  %50 = vmatprep.subr.mxu0 0.0
  %51 = vmatpush1.msra.mxu0 0.0
  %52 = vmatprep.subr.mxu0 0.0
  %53 = vmatpush1.msra.mxu0 0.0
  %54 = vmatprep.subr.mxu0 0.0
  %55 = vmatpush1.msra.mxu0 0.0
  %56 = vmatprep.subr.mxu0 0.0
  %57 = vmatpush1.msra.mxu0 0.0
  %58 = vmatprep.subr.mxu0 0.0
  %59 = vmatpush1.msra.mxu0 0.0
  %60 = vmatprep.subr.mxu0 0.0
  %61 = vmatpush1.msra.mxu0 0.0
  %62 = vmatprep.subr.mxu0 0.0
  %63 = vmatpush1.msra.mxu0 0.0
  %64 = vmatprep.subr.mxu0 0.0
  %65 = vmatpush1.msra.mxu0 0.0
  %66 = vmatprep.subr.mxu0 0.0
  %67 = vmatpush1.msra.mxu0 0.0
  %68 = vmatprep.subr.mxu0 0.0
  %69 = vmatpush1.msra.mxu0 %v38
  %70 = vmatprep.subr.mxu0 0.0
  %71 = vmatpush1.msra.mxu0 %v26
  %72 = vmatprep.subr.mxu0 0.0
  %73 = vmatpush2.msra.mxu0 0.0
  %74 = vmatprep.subr.mxu0 0.0
  %75 = vmatpush2.msra.mxu0 0.0
  %76 = vmatprep.subr.mxu0 0.0
  %77 = vmatpush2.msra.mxu0 0.0
  %78 = vmatprep.subr.mxu0 0.0
  %79 = vmatpush2.msra.mxu0 0.0
  %80 = vmatprep.subr.mxu0 0.0
  %81 = vmatpush2.msra.mxu0 0.0
  %82 = vmatprep.subr.mxu0 0.0
  %83 = vmatpush2.msra.mxu0 0.0
  %84 = vmatprep.subr.mxu0 0.0
  %85 = vmatpush2.msra.mxu0 0.0
  %86 = vmatprep.subr.mxu0 0.0
  %87 = vmatpush2.msra.mxu0 0.0
  %88 = vmatprep.subr.mxu0 0.0
  %89 = vmatpush2.msra.mxu0 0.0
  %90 = vmatprep.subr.mxu0 0.0
  %91 = vmatpush2.msra.mxu0 0.0
  %92 = vmatprep.subr.mxu0 0.0
  %93 = vmatpush2.msra.mxu0 0.0
  %94 = vmatprep.subr.mxu0 0.0
  %95 = vmatpush2.msra.mxu0 0.0
  %96 = vmatprep.subr.mxu0 0.0
  %97 = vmatpush2.msra.mxu0 0.0
  %98 = vmatprep.subr.mxu0 0.0
  %99 = vmatpush2.msra.mxu0 0.0
  %100 = vmatprep.subr.mxu0 0.0
  %101 = vmatpush2.msra.mxu0 0.0
  %102 = vmatprep.subr.mxu0 0.0
  %103 = vmatpush2.msra.mxu0 0.0
  %104 = vmatprep.mubr.f32.mxu0 0.0
  %105 = vmatmul.mubr.f32.gmra.mxu0 %v34
  %v106 = vpop.f32.mrf.mxu0
  %v107 = vadd.f32 %v31, %v106
  %v108 = vpop.f32.mrf.mxu0
  %109 = vdwg.mxu0
  %v110 = vxor.u32 %v107, 2147483648
  %v111 = vmul.f32 %v110, 1.442695
  %v112 = vpow.pop %v111
  %v113 = vadd.f32 %v112, 1.0
  %v114 = vrcp.pop %v113
  %v115 = vmul.f32 1.0, %v114
  %v116 = vtanh.pop %v107
  %v117 = vlaneseq
  %v118 = vshrl.u32 %v117, 7
  %v119 = vsub.s32 0, %v118
  %v120 = vrot.slane %v22, %v119
  %122 = vrot.lane.b32.xlu0 %v115, 96
  %v123 = vpop.permute.xlu0 %122
  %v125 = vmul.f32 %v120, %v123
  %v126 = vmul.f32 %v125, 1.442695
  %v127 = vpow.pop %v126
  %129 = vrot.lane.b32.xlu0 %v116, 32
  %v130 = vpop.permute.xlu0 %129
  %v132 = vmul.f32 %v115, %v130
  %v133 = vmul.f32 %v132, %v127
  %v134 = vtanh.pop %v133
  %136 = vrot.lane.b32.xlu0 %v134, 64
  %v137 = vpop.permute.xlu0 %136
  %v139 = vmul.f32 %v115, %v137
  %141 = vrot.lane.b32.xlu0 %v139, 64
  %v142 = vpop.permute.xlu0 %141
  %vm144 = vcmask 261120
  %v145 = vsel %vm144, %v142, 0.0
  %146 = vadd.xlane.f32.xlu0 %v145
  %v147 = vpop.xlane.xlu0 %146
  %v148 = vrcp.pop 32.0
  %v149 = vmul.f32 %v147, %v148
  %v150 = vsub.f32 %v139, %v149
  %v151 = vmul.f32 %v150, %v150
  %153 = vrot.lane.b32.xlu0 %v151, 64
  %v154 = vpop.permute.xlu0 %153
  %v156 = vsel %vm144, %v154, 0.0
  %157 = vadd.xlane.f32.xlu0 %v156
  %v158 = vpop.xlane.xlu0 %157
  %v159 = vmul.f32 %v158, %v148
  %v160 = vadd.f32 %v159, 1e-05
  %v161 = vrsqrt.pop %v160
  %v162 = vmul.f32 %v150, %v161
  %164 = vrot.lane.b32.xlu0 %v120, 32
  %v165 = vpop.permute.xlu0 %164
  %v167 = vmul.f32 %v162, %v165
  %v168 = vadd.f32 %v167, %v120
  %v169 = vld [vmem:[%s2] sm:$0xff]
  %v170 = vld [vmem:[%s2 + $0x8] sm:$0xff]
  %v171 = vld [vmem:[%s2 + $0x10] sm:$0xff]
  %v172 = vld [vmem:[%s2 + $0x18] sm:$0xff]
  %v173 = vlaneseq
  %v174 = vshrl.u32 %v173, 7
  %v175 = vsub.s32 0, %v174
  %v176 = vrot.slane %v21, %v175
  %178 = vrot.lane.b32.xlu0 %v168, 64
  %v179 = vpop.permute.xlu0 %178
  %v180 = vsel %vm144, %v179, 0
  %182 = vmatprep.subr.mxu0 0.0
  %183 = vmatpush1.msra.mxu0 0.0
  %184 = vmatprep.subr.mxu0 0.0
  %185 = vmatpush1.msra.mxu0 0.0
  %186 = vmatprep.subr.mxu0 0.0
  %187 = vmatpush1.msra.mxu0 0.0
  %188 = vmatprep.subr.mxu0 0.0
  %189 = vmatpush1.msra.mxu0 0.0
  %190 = vmatprep.subr.mxu0 0.0
  %191 = vmatpush1.msra.mxu0 0.0
  %192 = vmatprep.subr.mxu0 0.0
  %193 = vmatpush1.msra.mxu0 0.0
  %194 = vmatprep.subr.mxu0 0.0
  %195 = vmatpush1.msra.mxu0 0.0
  %196 = vmatprep.subr.mxu0 0.0
  %197 = vmatpush1.msra.mxu0 0.0
  %198 = vmatprep.subr.mxu0 0.0
  %199 = vmatpush1.msra.mxu0 0.0
  %200 = vmatprep.subr.mxu0 0.0
  %201 = vmatpush1.msra.mxu0 0.0
  %202 = vmatprep.subr.mxu0 0.0
  %203 = vmatpush1.msra.mxu0 0.0
  %204 = vmatprep.subr.mxu0 0.0
  %205 = vmatpush1.msra.mxu0 0.0
  %206 = vmatprep.subr.mxu0 0.0
  %207 = vmatpush1.msra.mxu0 %v172
  %208 = vmatprep.subr.mxu0 0.0
  %209 = vmatpush1.msra.mxu0 %v171
  %210 = vmatprep.subr.mxu0 0.0
  %211 = vmatpush1.msra.mxu0 %v170
  %212 = vmatprep.subr.mxu0 0.0
  %213 = vmatpush1.msra.mxu0 %v169
  %214 = vmatprep.subr.mxu0 0.0
  %215 = vmatpush2.msra.mxu0 0.0
  %216 = vmatprep.subr.mxu0 0.0
  %217 = vmatpush2.msra.mxu0 0.0
  %218 = vmatprep.subr.mxu0 0.0
  %219 = vmatpush2.msra.mxu0 0.0
  %220 = vmatprep.subr.mxu0 0.0
  %221 = vmatpush2.msra.mxu0 0.0
  %222 = vmatprep.subr.mxu0 0.0
  %223 = vmatpush2.msra.mxu0 0.0
  %224 = vmatprep.subr.mxu0 0.0
  %225 = vmatpush2.msra.mxu0 0.0
  %226 = vmatprep.subr.mxu0 0.0
  %227 = vmatpush2.msra.mxu0 0.0
  %228 = vmatprep.subr.mxu0 0.0
  %229 = vmatpush2.msra.mxu0 0.0
  %230 = vmatprep.subr.mxu0 0.0
  %231 = vmatpush2.msra.mxu0 0.0
  %232 = vmatprep.subr.mxu0 0.0
  %233 = vmatpush2.msra.mxu0 0.0
  %234 = vmatprep.subr.mxu0 0.0
  %235 = vmatpush2.msra.mxu0 0.0
  %236 = vmatprep.subr.mxu0 0.0
  %237 = vmatpush2.msra.mxu0 0.0
  %238 = vmatprep.subr.mxu0 0.0
  %239 = vmatpush2.msra.mxu0 0.0
  %240 = vmatprep.subr.mxu0 0.0
  %241 = vmatpush2.msra.mxu0 0.0
  %242 = vmatprep.subr.mxu0 0.0
  %243 = vmatpush2.msra.mxu0 0.0
  %244 = vmatprep.subr.mxu0 0.0
  %245 = vmatpush2.msra.mxu0 0.0
  %246 = vmatprep.mubr.f32.mxu0 0.0
  %247 = vmatmul.mubr.f32.gmra.mxu0 %v180
  %v248 = vpop.f32.mrf.mxu0
  %v249 = vadd.f32 %v176, %v248
  %v250 = vpop.f32.mrf.mxu0
  %251 = vdwg.mxu0
  %v252 = vxor.u32 %v249, 2147483648
  %v253 = vmul.f32 %v252, 1.442695
  %v254 = vpow.pop %v253
  %v255 = vadd.f32 %v254, 1.0
  %v256 = vrcp.pop %v255
  %v257 = vmul.f32 1.0, %v256
  %v258 = vtanh.pop %v249
  %v259 = vlaneseq
  %v260 = vshrl.u32 %v259, 7
  %v261 = vsub.s32 0, %v260
  %v262 = vrot.slane %v23, %v261
  %264 = vrot.lane.b32.xlu0 %v257, 96
  %v265 = vpop.permute.xlu0 %264
  %v267 = vmul.f32 %v262, %v265
  %v268 = vmul.f32 %v267, 1.442695
  %v269 = vpow.pop %v268
  %271 = vrot.lane.b32.xlu0 %v258, 32
  %v272 = vpop.permute.xlu0 %271
  %v274 = vmul.f32 %v257, %v272
  %v275 = vmul.f32 %v274, %v269
  %v276 = vtanh.pop %v275
  %278 = vrot.lane.b32.xlu0 %v276, 64
  %v279 = vpop.permute.xlu0 %278
  %v281 = vmul.f32 %v257, %v279
  %283 = vrot.lane.b32.xlu0 %v281, 64
  %v284 = vpop.permute.xlu0 %283
  %v286 = vsel %vm144, %v284, 0.0
  %287 = vadd.xlane.f32.xlu0 %v286
  %v288 = vpop.xlane.xlu0 %287
  %v289 = vmul.f32 %v288, %v148
  %v290 = vsub.f32 %v281, %v289
  %v291 = vmul.f32 %v290, %v290
  %293 = vrot.lane.b32.xlu0 %v291, 64
  %v294 = vpop.permute.xlu0 %293
  %v296 = vsel %vm144, %v294, 0.0
  %297 = vadd.xlane.f32.xlu0 %v296
  %v298 = vpop.xlane.xlu0 %297
  %v299 = vmul.f32 %v298, %v148
  %v300 = vadd.f32 %v299, 1e-05
  %v301 = vrsqrt.pop %v300
  %v302 = vmul.f32 %v290, %v301
  %304 = vrot.lane.b32.xlu0 %v262, 32
  %v305 = vpop.permute.xlu0 %304
  %v307 = vmul.f32 %v302, %v305
  %v308 = vadd.f32 %v307, %v262
  %v309 = vld [vmem:[%s4] sm:$0xff]
  %v310 = vld [vmem:[%s4 + $0x8] sm:$0xff]
  %v311 = vld [vmem:[%s4 + $0x10] sm:$0xff]
  %v312 = vld [vmem:[%s4 + $0x18] sm:$0xff]
  %v313 = vlaneseq
  %v314 = vshrl.u32 %v313, 7
  %v315 = vsub.s32 0, %v314
  %v316 = vrot.slane %v24, %v315
  %318 = vrot.lane.b32.xlu0 %v308, 64
  %v319 = vpop.permute.xlu0 %318
  %v320 = vsel %vm144, %v319, 0
  %322 = vmatprep.subr.mxu0 0.0
  %323 = vmatpush1.msra.mxu0 0.0
  %324 = vmatprep.subr.mxu0 0.0
  %325 = vmatpush1.msra.mxu0 0.0
  %326 = vmatprep.subr.mxu0 0.0
  %327 = vmatpush1.msra.mxu0 0.0
  %328 = vmatprep.subr.mxu0 0.0
  %329 = vmatpush1.msra.mxu0 0.0
  %330 = vmatprep.subr.mxu0 0.0
  %331 = vmatpush1.msra.mxu0 0.0
  %332 = vmatprep.subr.mxu0 0.0
  %333 = vmatpush1.msra.mxu0 0.0
  %334 = vmatprep.subr.mxu0 0.0
  %335 = vmatpush1.msra.mxu0 0.0
  %336 = vmatprep.subr.mxu0 0.0
  %337 = vmatpush1.msra.mxu0 0.0
  %338 = vmatprep.subr.mxu0 0.0
  %339 = vmatpush1.msra.mxu0 0.0
  %340 = vmatprep.subr.mxu0 0.0
  %341 = vmatpush1.msra.mxu0 0.0
  %342 = vmatprep.subr.mxu0 0.0
  %343 = vmatpush1.msra.mxu0 0.0
  %344 = vmatprep.subr.mxu0 0.0
  %345 = vmatpush1.msra.mxu0 0.0
  %346 = vmatprep.subr.mxu0 0.0
  %347 = vmatpush1.msra.mxu0 %v312
  %348 = vmatprep.subr.mxu0 0.0
  %349 = vmatpush1.msra.mxu0 %v311
  %350 = vmatprep.subr.mxu0 0.0
  %351 = vmatpush1.msra.mxu0 %v310
  %352 = vmatprep.subr.mxu0 0.0
  %353 = vmatpush1.msra.mxu0 %v309
  %354 = vmatprep.subr.mxu0 0.0
  %355 = vmatpush2.msra.mxu0 0.0
  %356 = vmatprep.subr.mxu0 0.0
  %357 = vmatpush2.msra.mxu0 0.0
  %358 = vmatprep.subr.mxu0 0.0
  %359 = vmatpush2.msra.mxu0 0.0
  %360 = vmatprep.subr.mxu0 0.0
  %361 = vmatpush2.msra.mxu0 0.0
  %362 = vmatprep.subr.mxu0 0.0
  %363 = vmatpush2.msra.mxu0 0.0
  %364 = vmatprep.subr.mxu0 0.0
  %365 = vmatpush2.msra.mxu0 0.0
  %366 = vmatprep.subr.mxu0 0.0
  %367 = vmatpush2.msra.mxu0 0.0
  %368 = vmatprep.subr.mxu0 0.0
  %369 = vmatpush2.msra.mxu0 0.0
  %370 = vmatprep.subr.mxu0 0.0
  %371 = vmatpush2.msra.mxu0 0.0
  %372 = vmatprep.subr.mxu0 0.0
  %373 = vmatpush2.msra.mxu0 0.0
  %374 = vmatprep.subr.mxu0 0.0
  %375 = vmatpush2.msra.mxu0 0.0
  %376 = vmatprep.subr.mxu0 0.0
  %377 = vmatpush2.msra.mxu0 0.0
  %378 = vmatprep.subr.mxu0 0.0
  %379 = vmatpush2.msra.mxu0 0.0
  %380 = vmatprep.subr.mxu0 0.0
  %381 = vmatpush2.msra.mxu0 0.0
  %382 = vmatprep.subr.mxu0 0.0
  %383 = vmatpush2.msra.mxu0 0.0
  %384 = vmatprep.subr.mxu0 0.0
  %385 = vmatpush2.msra.mxu0 0.0
  %386 = vmatprep.mubr.f32.mxu0 0.0
  %387 = vmatmul.mubr.f32.gmra.mxu0 %v320
  %v388 = vpop.f32.mrf.mxu0
  %v389 = vadd.f32 %v316, %v388
  %v390 = vpop.f32.mrf.mxu0
  %391 = vdwg.mxu0
  %vm392 = vcmask 64512
  %393 = vst.msk [vmem:[%s5] sm:$0xff] %vm392, %v389
  // Predicated region
  $region22: #{weather_xlstm_forward.1} parent=0 // pred_check
    _
  $region23: #{weather_xlstm_forward.1} parent=0 // pred_check_branch
    %395 = sbr.rel (0) target = $region25
  $region24: #{weather_xlstm_forward.1} parent=0 // pred_region
    _
  $region25: #{weather_xlstm_forward.1} parent=0 // pred_fallthru
    _
  // Predicated region
  $region26: #{weather_xlstm_forward.1} parent=0 // pred_check
    _
  $region27: #{weather_xlstm_forward.1} parent=0 // pred_check_branch
    %397 = sbr.rel (0) target = $region29
  $region28: #{weather_xlstm_forward.1} parent=0 // pred_region
    _
  $region29: #{weather_xlstm_forward.1} parent=0 // pred_fallthru
    _

</llo_original>
